<compile_context>
chip_gen: v5e
topology: v5e:2x2
jax: 0.10.0
libtpu: 0.0.40
codegen_flags: <defaults>
</compile_context>

<pallas_src>
import functools
import math

import jax
import jax.numpy as jnp
from jax import lax
from jax.experimental import pallas as pl
from jax.experimental.pallas import tpu as pltpu


def _round_up(x, m):
    return (x + m - 1) // m * m


def _pick_tile(dim, pref, unit):
    """Largest tile <= pref that divides `dim` (dim is a multiple of `unit`)."""
    if dim <= pref:
        return dim
    t = (pref // unit) * unit
    while t > unit:
        if dim % t == 0:
            return t
        t -= unit
    return unit


# ----------------------- tiled linear projection (x @ W^T + b) -----------------------

def _matmul_bias_kernel(x_ref, wt_ref, b_ref, o_ref):
    # grid = (M/tm, N/tn, K/tk); K is the innermost ("arbitrary") reduction axis.
    # The f32 output block is resident across k (out_spec ignores k) and doubles
    # as the accumulator -> no VMEM scratch, no final acc->out copy.
    @pl.when(pl.program_id(2) == 0)
    def _():
        o_ref[...] = jnp.zeros_like(o_ref)

    o_ref[...] += jnp.dot(x_ref[...].astype(jnp.bfloat16), wt_ref[...],
                          preferred_element_type=jnp.float32)

    @pl.when(pl.program_id(2) == pl.num_programs(2) - 1)
    def _():
        o_ref[...] += b_ref[...]


def pallas_linear(x2d, wt_p, b_p, d_out, *, tm=512, tn=512, tk=512):
    """x2d: (M, Din) f32.  wt_p: (Kp, Np) bf16, pre-transposed & pre-padded.
    b_p: (1, Np) f32, pre-padded.  Returns (M, d_out) f32."""
    M, Din = x2d.shape
    Kp, Np = wt_p.shape
    Mp = _round_up(M, 8)

    # zero-pad the activation only when needed (no copy for aligned shapes)
    if Mp != M or Kp != Din:
        x2d = jnp.pad(x2d, ((0, Mp - M), (0, Kp - Din)))

    tm = _pick_tile(Mp, tm, 8)
    tn = _pick_tile(Np, tn, 128)
    tk = _pick_tile(Kp, tk, 128)

    out = pl.pallas_call(
        _matmul_bias_kernel,
        out_shape=jax.ShapeDtypeStruct((Mp, Np), jnp.float32),
        grid=(Mp // tm, Np // tn, Kp // tk),
        in_specs=[
            pl.BlockSpec((tm, tk), lambda i, j, k: (i, k)),
            pl.BlockSpec((tk, tn), lambda i, j, k: (k, j)),
            pl.BlockSpec((1, tn), lambda i, j, k: (0, j)),
        ],
        out_specs=pl.BlockSpec((tm, tn), lambda i, j, k: (i, j)),
        compiler_params=pltpu.CompilerParams(
            dimension_semantics=("parallel", "parallel", "arbitrary"),
            vmem_limit_bytes=48 * 1024 * 1024),
    )(x2d, wt_p, b_p)
    return out[:M, :d_out]


# --------------------- multi-head scaled-dot-product attention ---------------------

def _mha_attn_kernel(q_ref, k_ref, v_ref, bias_ref, o_ref, w_ref, *,
                     n_heads, d_k, scale):
    """Blocks: q (1,tq,D) f32, k/v (1,Lk,D) f32, bias (1, 1|tq, Lk) f32,
    o (1,tq,D) f32 [heads merged, lane-dense], w (1,H,tq,Lk) f32."""
    q = (q_ref[0] * scale).astype(jnp.bfloat16)   # fold 1/sqrt(dk) into q
    k = k_ref[0].astype(jnp.bfloat16)
    v = v_ref[0].astype(jnp.bfloat16)
    bias = bias_ref[0]                            # additive mask bias (f32)

    ctx_parts = []
    for h in range(n_heads):
        lo, hi = h * d_k, (h + 1) * d_k
        qh, kh, vh = q[:, lo:hi], k[:, lo:hi], v[:, lo:hi]

        # scores = (q*scale) @ k^T  (bf16 MXU operands, f32 accumulation)
        s = lax.dot_general(qh, kh, (((1,), (1,)), ((), ())),
                            preferred_element_type=jnp.float32)
        s = s + bias                              # single add; broadcasts rows

        # numerically stable softmax in f32; exact divide because the weights
        # tensor is a module output (approx reciprocal would distort it).
        m = jnp.max(s, axis=-1, keepdims=True)
        e = jnp.exp(s - m)
        w = e / jnp.sum(e, axis=-1, keepdims=True)
        w_ref[0, h] = w                           # lane-dense (tq, Lk) store

        ctx_parts.append(jnp.dot(w.astype(jnp.bfloat16), vh,
                                 preferred_element_type=jnp.float32))

    # merge heads -> single lane-dense (tq, D) store
    o_ref[0] = jnp.concatenate(ctx_parts, axis=-1).astype(o_ref.dtype)


def pallas_mha_attention(q2, k2, v2, mask, n_heads, *, tq_pref=256):
    """q2: (B,Lq,D); k2,v2: (B,Lk,D); mask: (B, 1|Lq, Lk) or None.
    Returns merged-heads context (B,Lq,D) f32 and weights (B,H,Lq,Lk) f32."""
    B, Lq, D = q2.shape
    Lk = k2.shape[1]
    d_k = D // n_heads

    # precomputed additive mask bias (replaces per-head compare+select)
    if mask is None:
        bias = jnp.zeros((B, 1, Lk), jnp.float32)
    else:
        bias = jnp.where(mask == 0, jnp.float32(-1e30), jnp.float32(0.0))
    Lm = bias.shape[1]

    # query-tile size from a per-step VMEM budget (weights block dominates)
    budget = 8 * 1024 * 1024
    per_row = 2 * 4 * (n_heads * Lk + 2 * D)      # f32, x2 double buffering
    tq = max(8, min(tq_pref, (budget // per_row) // 8 * 8))
    tq = min(tq, _round_up(Lq, 8))
    Lqp = _round_up(Lq, tq)

    if Lqp != Lq:
        q2 = jnp.pad(q2, ((0, 0), (0, Lqp - Lq), (0, 0)))
    if Lm > 1 and Lm != Lqp:
        bias = jnp.pad(bias, ((0, 0), (0, Lqp - Lm), (0, 0)))

    if Lm == 1:
        bias_spec = pl.BlockSpec((1, 1, Lk), lambda b, qi: (b, 0, 0))
    else:
        bias_spec = pl.BlockSpec((1, tq, Lk), lambda b, qi: (b, qi, 0))

    kernel = functools.partial(_mha_attn_kernel, n_heads=n_heads, d_k=d_k,
                               scale=1.0 / math.sqrt(d_k))

    ctx, weights = pl.pallas_call(
        kernel,
        out_shape=(
            jax.ShapeDtypeStruct((B, Lqp, D), jnp.float32),
            jax.ShapeDtypeStruct((B, n_heads, Lqp, Lk), jnp.float32),
        ),
        grid=(B, Lqp // tq),
        in_specs=[
            pl.BlockSpec((1, tq, D), lambda b, qi: (b, qi, 0)),
            pl.BlockSpec((1, Lk, D), lambda b, qi: (b, 0, 0)),
            pl.BlockSpec((1, Lk, D), lambda b, qi: (b, 0, 0)),
            bias_spec,
        ],
        out_specs=(
            pl.BlockSpec((1, tq, D), lambda b, qi: (b, qi, 0)),
            pl.BlockSpec((1, n_heads, tq, Lk), lambda b, qi: (b, 0, qi, 0)),
        ),
        compiler_params=pltpu.CompilerParams(
            dimension_semantics=("parallel", "parallel"),
            vmem_limit_bytes=48 * 1024 * 1024),
    )(q2, k2, v2, bias)

    if Lqp != Lq:
        ctx = ctx[:, :Lq, :]
        weights = weights[:, :, :Lq, :]
    return ctx, weights


# --------------------------- one-time parameter packing ---------------------------

def prepare_mha_params(params, d_model):
    """Transpose to (Din, Dout), pad to (8,128)-aligned tiles, cast to bf16,
    and pre-concatenate the fused QKV weight/bias -- done once, not per call."""
    Kp = _round_up(d_model, 128)

    def pack_w(w):                                 # (Dout, Din) -> (Kp, Np) bf16
        d_out, d_in = w.shape
        Np = _round_up(d_out, 128)
        wt = jnp.pad(jnp.transpose(w), ((0, Kp - d_in), (0, Np - d_out)))
        return wt.astype(jnp.bfloat16)

    def pack_b(b):
        Np = _round_up(b.shape[0], 128)
        return jnp.pad(b, (0, Np - b.shape[0])).reshape(1, Np).astype(jnp.float32)

    w_qkv = jnp.concatenate([params["wq"], params["wk"], params["wv"]], axis=0)
    b_qkv = jnp.concatenate([params["bq"], params["bk"], params["bv"]], axis=0)
    return {
        "wqkv_t": pack_w(w_qkv), "bqkv": pack_b(b_qkv),
        "wq_t": pack_w(params["wq"]), "bq": pack_b(params["bq"]),
        "wk_t": pack_w(params["wk"]), "bk": pack_b(params["bk"]),
        "wv_t": pack_w(params["wv"]), "bv": pack_b(params["bv"]),
        "wo_t": pack_w(params["wo"]), "bo": pack_b(params["bo"]),
    }


# ------------------------------------ full module fwd ------------------------------------

def multi_head_attention(query, key, value, mask, packed, n_heads,
                         *, self_attention=None):
    """query: (B, Lq, D); key/value: (B, Lk, D); mask: (B,1,Lk) or (B,Lq,Lk).
    `packed` comes from prepare_mha_params.  Dropout is identity (eval mode)."""
    B, Lq, D = query.shape
    Lk = key.shape[1]

    if self_attention is None:
        self_attention = (query is key) and (key is value)

    if self_attention:
        # fused QKV projection: one launch, activation read once, 3x MXU N-dim
        qkv = pallas_linear(query.reshape(B * Lq, D),
                            packed["wqkv_t"], packed["bqkv"], 3 * D)
        Q2 = qkv[:, :D].reshape(B, Lq, D)
        K2 = qkv[:, D:2 * D].reshape(B, Lq, D)
        V2 = qkv[:, 2 * D:].reshape(B, Lq, D)
    else:
        Q2 = pallas_linear(query.reshape(B * Lq, D), packed["wq_t"], packed["bq"], D).reshape(B, Lq, D)
        K2 = pallas_linear(key.reshape(B * Lk, D), packed["wk_t"], packed["bk"], D).reshape(B, Lk, D)
        V2 = pallas_linear(value.reshape(B * Lk, D), packed["wv_t"], packed["bv"], D).reshape(B, Lk, D)

    # attention kernel consumes (B, L, D) directly: heads are split in-kernel,
    # context comes back already merged/lane-dense -> no XLA transposes.
    ctx, attn_weights = pallas_mha_attention(Q2, K2, V2, mask, n_heads)

    out = pallas_linear(ctx.reshape(B * Lq, D), packed["wo_t"], packed["bo"], D)
    return out.reshape(B, Lq, D), attn_weights


# ---------------------------------------- reference ----------------------------------------

def _reference_mha(query, key, value, mask, params, n_heads):
    B, Lq, D = query.shape
    Lk = key.shape[1]
    dk = D // n_heads

    def lin(x, w, b):
        return x @ w.T + b

    def split(x, L):
        return x.reshape(B, L, n_heads, dk).transpose(0, 2, 1, 3)

    Q = split(lin(query, params["wq"], params["bq"]), Lq)
    K = split(lin(key, params["wk"], params["bk"]), Lk)
    V = split(lin(value, params["wv"], params["bv"]), Lk)
    scores = jnp.einsum('bhqd,bhkd->bhqk', Q, K) / math.sqrt(dk)
    scores = jnp.where(mask[:, None, :, :] == 0, -1e30, scores)
    w = jax.nn.softmax(scores, axis=-1)
    ctx = jnp.einsum('bhqk,bhkd->bhqd', w, V).transpose(0, 2, 1, 3).reshape(B, Lq, D)
    out = lin(ctx, params["wo"], params["bo"])
    return out, w


# ------------------------------------------- main -------------------------------------------

def _init_linear(key, d_out, d_in):
    kw, kb = jax.random.split(key)
    bound = 1.0 / math.sqrt(d_in)
    w = jax.random.uniform(kw, (d_out, d_in), jnp.float32, -bound, bound)
    b = jax.random.uniform(kb, (d_out,), jnp.float32, -bound, bound)
    return w, b


if __name__ == "__main__":
    B, L, D, H = 2, 8, 32, 4          # batch, seq, d_model, n_heads (d_k = 8)

    root = jax.random.PRNGKey(0)
    kq, kk, kv, ko, kx = jax.random.split(root, 5)

    params = {}
    params["wq"], params["bq"] = _init_linear(kq, D, D)
    params["wk"], params["bk"] = _init_linear(kk, D, D)
    params["wv"], params["bv"] = _init_linear(kv, D, D)
    params["wo"], params["bo"] = _init_linear(ko, D, D)

    packed = prepare_mha_params(params, D)        # one-time weight packing

    x = jax.random.normal(kx, (B, L, D), jnp.float32)

    # source mask [B, 1, L]: mask out the last two key positions of batch 1
    mask = jnp.ones((B, 1, L), jnp.float32)
    mask = mask.at[1, 0, 6:].set(0.0)

    # self-attention (query = key = value) -> exercises the fused-QKV path
    out, attn_w = multi_head_attention(x, x, x, mask, packed, n_heads=H)
    out = jax.block_until_ready(out)
    attn_w = jax.block_until_ready(attn_w)

    assert out.shape == (B, L, D) and attn_w.shape == (B, H, L, L)
    assert bool(jnp.all(jnp.isfinite(out)))
    # attention rows sum to 1 (exact divide inside the kernel)
    assert bool(jnp.allclose(jnp.sum(attn_w, axis=-1), 1.0, atol=1e-3))

    # pure-JAX f32 reference (kernel uses bf16 MXU operands -> loose tolerances)
    ref_out, ref_w = _reference_mha(x, x, x, mask, params, H)
    assert bool(jnp.allclose(out, ref_out, atol=5e-2, rtol=5e-2))
    assert bool(jnp.allclose(attn_w, ref_w, atol=2e-2, rtol=2e-2))

    print("KERNEL_OK")
</pallas_src>

<mosaic_0001>
module attributes {stable_mosaic.version = 11 : i64} {
  func.func @_matmul_bias_kernel(%arg0: i32, %arg1: i32, %arg2: i32, %arg3: memref<16x128xf32, #tpu.memory_space<vmem>>, %arg4: memref<128x128xbf16, #tpu.memory_space<vmem>>, %arg5: memref<1x128xf32, #tpu.memory_space<vmem>>, %arg6: memref<16x128xf32, #tpu.memory_space<vmem>>) attributes {dimension_semantics = [#tpu.dimension_semantics<parallel>, #tpu.dimension_semantics<parallel>, #tpu.dimension_semantics<arbitrary>], iteration_bounds = array<i64: 1, 1, 1>, scalar_prefetch = 0 : i64, scratch_operands = 0 : i64, tpu.core_type = #tpu.core_type<tc>, window_params = [{transform_indices = @transform_0, window_bounds = array<i64: 16, 128>}, {transform_indices = @transform_1, window_bounds = array<i64: 128, 128>}, {transform_indices = @transform_2, window_bounds = array<i64: 1, 128>}, {transform_indices = @transform_3, window_bounds = array<i64: 16, 128>}]} {
    %c0_i32 = arith.constant 0 : i32
    %0 = arith.cmpi eq, %arg2, %c0_i32 : i32
    %1 = arith.extui %0 : i1 to i32
    %c0_i32_0 = arith.constant 0 : i32
    %2 = arith.cmpi ne, %1, %c0_i32_0 : i32
    scf.if %2 {
      %cst_10 = arith.constant 0.000000e+00 : f32
      %13 = vector.broadcast %cst_10 : f32 to vector<16x128xf32>
      %c0_11 = arith.constant 0 : index
      %c0_12 = arith.constant 0 : index
      %14 = vector.load %arg6[%c0_11, %c0_12] : memref<16x128xf32, #tpu.memory_space<vmem>>, vector<16x128xf32>
      tpu.vector_store %arg6[%c0_11, %c0_12], %13 {strides = array<i32>} : memref<16x128xf32, #tpu.memory_space<vmem>>, vector<16x128xf32>,
    } else {
    }
    %c0 = arith.constant 0 : index
    %c0_1 = arith.constant 0 : index
    %3 = vector.load %arg6[%c0, %c0_1] : memref<16x128xf32, #tpu.memory_space<vmem>>, vector<16x128xf32>
    %c0_2 = arith.constant 0 : index
    %c0_3 = arith.constant 0 : index
    %4 = vector.load %arg3[%c0_2, %c0_3] : memref<16x128xf32, #tpu.memory_space<vmem>>, vector<16x128xf32>
    %5 = arith.truncf %4 : vector<16x128xf32> to vector<16x128xbf16>
    %c0_4 = arith.constant 0 : index
    %c0_5 = arith.constant 0 : index
    %6 = vector.load %arg4[%c0_4, %c0_5] : memref<128x128xbf16, #tpu.memory_space<vmem>>, vector<128x128xbf16>
    %cst = arith.constant dense<0.000000e+00> : vector<16x128xf32>
    %7 = tpu.matmul %5, %6, %cst {dimension_numbers = #tpu.dot_dimension_numbers<[1], [0], [0], [1], [0, 0, 1, 1], [], []>} : vector<16x128xbf16>, vector<128x128xbf16>, vector<16x128xf32> -> vector<16x128xf32>
    %8 = arith.addf %3, %7 : vector<16x128xf32>
    %c0_6 = arith.constant 0 : index
    %c0_7 = arith.constant 0 : index
    %9 = vector.load %arg6[%c0_6, %c0_7] : memref<16x128xf32, #tpu.memory_space<vmem>>, vector<16x128xf32>
    tpu.vector_store %arg6[%c0_6, %c0_7], %8 {strides = array<i32>} : memref<16x128xf32, #tpu.memory_space<vmem>>, vector<16x128xf32>,
    %c0_i32_8 = arith.constant 0 : i32
    %10 = arith.cmpi eq, %arg2, %c0_i32_8 : i32
    %11 = arith.extui %10 : i1 to i32
    %c0_i32_9 = arith.constant 0 : i32
    %12 = arith.cmpi ne, %11, %c0_i32_9 : i32
    scf.if %12 {
      %c0_10 = arith.constant 0 : index
      %c0_11 = arith.constant 0 : index
      %13 = vector.load %arg6[%c0_10, %c0_11] : memref<16x128xf32, #tpu.memory_space<vmem>>, vector<16x128xf32>
      %c0_12 = arith.constant 0 : index
      %c0_13 = arith.constant 0 : index
      %14 = vector.load %arg5[%c0_12, %c0_13] : memref<1x128xf32, #tpu.memory_space<vmem>>, vector<1x128xf32>
      %15 = vector.broadcast %14 : vector<1x128xf32> to vector<16x128xf32>
      %16 = arith.addf %13, %15 : vector<16x128xf32>
      %c0_14 = arith.constant 0 : index
      %c0_15 = arith.constant 0 : index
      %17 = vector.load %arg6[%c0_14, %c0_15] : memref<16x128xf32, #tpu.memory_space<vmem>>, vector<16x128xf32>
      tpu.vector_store %arg6[%c0_14, %c0_15], %16 {strides = array<i32>} : memref<16x128xf32, #tpu.memory_space<vmem>>, vector<16x128xf32>,
    } else {
    }
    return
  }
  func.func @transform_0(%arg0: i32, %arg1: i32, %arg2: i32) -> (i32, i32) {
    %c0_i32 = arith.constant 0 : i32
    return %arg0, %arg2 : i32, i32
  }
  func.func @transform_1(%arg0: i32, %arg1: i32, %arg2: i32) -> (i32, i32) {
    %c0_i32 = arith.constant 0 : i32
    return %arg2, %arg1 : i32, i32
  }
  func.func @transform_2(%arg0: i32, %arg1: i32, %arg2: i32) -> (i32, i32) {
    %c0_i32 = arith.constant 0 : i32
    %c0_i32_0 = arith.constant 0 : i32
    return %c0_i32, %arg1 : i32, i32
  }
  func.func @transform_3(%arg0: i32, %arg1: i32, %arg2: i32) -> (i32, i32) {
    %c0_i32 = arith.constant 0 : i32
    return %arg0, %arg1 : i32, i32
  }
}

</mosaic_0001>

<llo_original>
// kernel: tpu_custom_call.1
$region0: #{tpu_custom_call.1}
  #allocation0 [shape = 'u32[]', space=smem, size = 0x4, offset = 0x4, fixed_abs, tag = 'smem constant byte address 0x4 - core index']
  #allocation1 [shape = 'u32[72,128]{1,0:T(1,128)}', space=vmem, size = 0x9000, scoped, tag = 'internal scratch']
  %s0 = inlined_call_operand.hbm [shape: f32[16,128], index: 0, kind: input, shape index: {}]
  %s1 = inlined_call_operand.hbm [shape: bf16[128,128], index: 1, kind: input, shape index: {}]
  %s2 = inlined_call_operand.vmem [shape: f32[1,128], index: 2, kind: input, shape index: {}]
  %s3 = inlined_call_operand.hbm [shape: f32[16,128], index: 3, kind: output, shape index: {}]
  %s4 = sld [smem:[#allocation0]]
  $region38: #{tpu_custom_call.1} parent=0
    _
  %s6 = ssub.s32 1, %s4
  %s7 = scalar_select 0, %s6, %s4
  $region1: #{tpu_custom_call.1} parent=0
    #allocation2 [shape = 'u8[8192]{0}', space=vmem, size = 0x2000, scoped, tag = 'input window, operand 0, single buffered']
    #allocation3 [shape = 's32[1]{0}', space=sflag, size = 0x4, scoped, tag = 'scoped memory for tpu_custom_call.1']
    #allocation4 [shape = 's32[1]{0}', space=sflag, size = 0x4, scoped, tag = 'scoped memory for tpu_custom_call.1']
    #allocation5 [shape = 'u8[32768]{0}', space=vmem, size = 0x8000, scoped, tag = 'input window, operand 1, single buffered']
    #allocation6 [shape = 's32[1]{0}', space=sflag, size = 0x4, scoped, tag = 'scoped memory for tpu_custom_call.1']
    #allocation7 [shape = 'u8[8192]{0}', space=vmem, size = 0x2000, scoped, tag = 'output window, operand 0, single buffered']
    %8 = vsyncpa [#allocation3], 0
    %9 = vsyncpa [#allocation6], 0
    %10 = vsyncpa [#allocation4], 0
    // Predicated region
    $region2: #{tpu_custom_call.1} parent=1 // pred_check
      _
    $region3: #{tpu_custom_call.1} parent=1 // pred_check_branch
      %12 = sbr.rel (0) target = $region5
    $region4: #{tpu_custom_call.1} parent=1 // pred_region
      %14 = vsyncadd [#allocation3], 0
      %s15 = sshll.u32 %s0, 4
      %s16 = int_to_ptr.hbm [resolvable:$true] %s15
      %s17 = sshll.u32 [#allocation2], 4
      %s18 = int_to_ptr.vmem [resolvable:$true] %s17
      %23 = dma.hbm_to_vmem [thread:$0]  %s16, 256, %s18, [#allocation3], 128, 128, 8
    $region5: #{tpu_custom_call.1} parent=1 // pred_fallthru
      _
    // Predicated region
    $region6: #{tpu_custom_call.1} parent=1 // pred_check
      _
    $region7: #{tpu_custom_call.1} parent=1 // pred_check_branch
      %25 = sbr.rel (0) target = $region9
    $region8: #{tpu_custom_call.1} parent=1 // pred_region
      %27 = vsyncadd [#allocation6], 0
      %s28 = sshll.u32 %s1, 4
      %s29 = int_to_ptr.hbm [resolvable:$true] %s28
      %s30 = sshll.u32 [#allocation5], 4
      %s31 = int_to_ptr.vmem [resolvable:$true] %s30
      %36 = dma.hbm_to_vmem [thread:$0]  %s29, 1024, %s31, [#allocation6], 64, 64, 4
    $region9: #{tpu_custom_call.1} parent=1 // pred_fallthru
      _
    // Predicated region
    $region10: #{tpu_custom_call.1} parent=1 // pred_check
      _
    $region11: #{tpu_custom_call.1} parent=1 // pred_check_branch
      %38 = sbr.rel (0) target = $region13
    $region12: #{tpu_custom_call.1} parent=1 // pred_region
      _
    $region13: #{tpu_custom_call.1} parent=1 // pred_fallthru
      _
    // Predicated region
    $region14: #{tpu_custom_call.1} parent=1 // pred_check
      _
    $region15: #{tpu_custom_call.1} parent=1 // pred_check_branch
      %40 = sbr.rel (0) target = $region17
    $region16: #{tpu_custom_call.1} parent=1 // pred_region
      %42 = dma.done [#allocation3], 256
    $region17: #{tpu_custom_call.1} parent=1 // pred_fallthru
      _
    // Predicated region
    $region18: #{tpu_custom_call.1} parent=1 // pred_check
      _
    $region19: #{tpu_custom_call.1} parent=1 // pred_check_branch
      %44 = sbr.rel (0) target = $region21
    $region20: #{tpu_custom_call.1} parent=1 // pred_region
      %46 = dma.done [#allocation6], 1024
    $region21: #{tpu_custom_call.1} parent=1 // pred_fallthru
      _
    %p47 = scmp.eq.s32.totalorder 0, 0
    // Predicated region
    $region22: #{tpu_custom_call.1} parent=1 // pred_check
      %p48 = pneg %p47
    $region23: #{tpu_custom_call.1} parent=1 // pred_check_branch
      %50 = sbr.rel (%p48) target = $region25
    $region24: #{tpu_custom_call.1} parent=1 // pred_region
      %51 = vst [vmem:[#allocation7] sm:$0xff] 0.0
      %52 = vst [vmem:[#allocation7 + $0x8] sm:$0xff] 0.0
    $region25: #{tpu_custom_call.1} parent=1 // pred_fallthru
      _
    %v53 = vld [vmem:[#allocation7] sm:$0xff]
    %v54 = vld [vmem:[#allocation7 + $0x8] sm:$0xff]
    %v55 = vld [vmem:[#allocation2] sm:$0xff]
    %v56 = vld [vmem:[#allocation2 + $0x8] sm:$0xff]
    %v57 = vpack.c.bf16 %v56, %v55
    %v58 = vld [vmem:[#allocation5] sm:$0xf]
    %v59 = vld [vmem:[#allocation5 + $0x4] sm:$0xf]
    %v60 = vld [vmem:[#allocation5 + $0x8] sm:$0xf]
    %v61 = vld [vmem:[#allocation5 + $0xc] sm:$0xf]
    %v62 = vld [vmem:[#allocation5 + $0x10] sm:$0xf]
    %v63 = vld [vmem:[#allocation5 + $0x14] sm:$0xf]
    %v64 = vld [vmem:[#allocation5 + $0x18] sm:$0xf]
    %v65 = vld [vmem:[#allocation5 + $0x1c] sm:$0xf]
    %v66 = vld [vmem:[#allocation5 + $0x20] sm:$0xf]
    %v67 = vld [vmem:[#allocation5 + $0x24] sm:$0xf]
    %v68 = vld [vmem:[#allocation5 + $0x28] sm:$0xf]
    %v69 = vld [vmem:[#allocation5 + $0x2c] sm:$0xf]
    %v70 = vld [vmem:[#allocation5 + $0x30] sm:$0xf]
    %v71 = vld [vmem:[#allocation5 + $0x34] sm:$0xf]
    %v72 = vld [vmem:[#allocation5 + $0x38] sm:$0xf]
    %v73 = vld [vmem:[#allocation5 + $0x3c] sm:$0xf]
    %v90 = vunpack.c.l.b16 %v58
    %v91 = vunpack.c.l.b16 %v59
    %v92 = vunpack.c.l.b16 %v60
    %v93 = vunpack.c.l.b16 %v61
    %v94 = vunpack.c.l.b16 %v62
    %v95 = vunpack.c.l.b16 %v63
    %v96 = vunpack.c.l.b16 %v64
    %v97 = vunpack.c.l.b16 %v65
    %v98 = vunpack.c.l.b16 %v66
    %v99 = vunpack.c.l.b16 %v67
    %v100 = vunpack.c.l.b16 %v68
    %v101 = vunpack.c.l.b16 %v69
    %v102 = vunpack.c.l.b16 %v70
    %v103 = vunpack.c.l.b16 %v71
    %v104 = vunpack.c.l.b16 %v72
    %v105 = vunpack.c.l.b16 %v73
    %v106 = vpack.c.b16 %v91, %v90
    %v107 = vpack.c.b16 %v93, %v92
    %v108 = vpack.c.b16 %v95, %v94
    %v109 = vpack.c.b16 %v97, %v96
    %v110 = vpack.c.b16 %v99, %v98
    %v111 = vpack.c.b16 %v101, %v100
    %v112 = vpack.c.b16 %v103, %v102
    %v113 = vpack.c.b16 %v105, %v104
    %122 = vmatpush.bf16.msra.mxu0 %v113
    %123 = vmatpush.bf16.msra.mxu0 %v112
    %124 = vmatpush.bf16.msra.mxu0 %v111
    %125 = vmatpush.bf16.msra.mxu0 %v110
    %126 = vmatpush.bf16.msra.mxu0 %v109
    %127 = vmatpush.bf16.msra.mxu0 %v108
    %128 = vmatpush.bf16.msra.mxu0 %v107
    %129 = vmatpush.bf16.msra.mxu0 %v106
    %130 = vmatmul.bf16.gmra.mxu0 %v57
    %v131 = vpop.f32.mrf.mxu0
    %v132 = vadd.f32 0.0, %v131
    %v133 = vpop.f32.mrf.mxu0
    %v134 = vadd.f32 0.0, %v133
    %135 = vdwg.mxu0
    %v136 = vadd.f32 %v53, %v132
    %v137 = vadd.f32 %v54, %v134
    %138 = vst [vmem:[#allocation7] sm:$0xff] %v136
    %139 = vst [vmem:[#allocation7 + $0x8] sm:$0xff] %v137
    // Predicated region
    $region26: #{tpu_custom_call.1} parent=1 // pred_check
      %p140 = pneg %p47
    $region27: #{tpu_custom_call.1} parent=1 // pred_check_branch
      %142 = sbr.rel (%p140) target = $region29
    $region28: #{tpu_custom_call.1} parent=1 // pred_region
      %v143 = vld [vmem:[#allocation7] sm:$0xff]
      %v144 = vld [vmem:[#allocation7 + $0x8] sm:$0xff]
      %v145 = vld [vmem:[%s2] sm:$0x1]
      %v147 = vperm.slane %v145, 0
      %v149 = vadd.f32 %v143, %v147
      %v150 = vadd.f32 %v144, %v147
      %151 = vst [vmem:[#allocation7] sm:$0xff] %v149
      %152 = vst [vmem:[#allocation7 + $0x8] sm:$0xff] %v150
    $region29: #{tpu_custom_call.1} parent=1 // pred_fallthru
      _
    // Predicated region
    $region30: #{tpu_custom_call.1} parent=1 // pred_check
      _
    $region31: #{tpu_custom_call.1} parent=1 // pred_check_branch
      %154 = sbr.rel (0) target = $region33
    $region32: #{tpu_custom_call.1} parent=1 // pred_region
      %156 = vsyncadd [#allocation4], 0
      %s157 = sshll.u32 [#allocation7], 4
      %s158 = int_to_ptr.vmem [resolvable:$true] %s157
      %s159 = sshll.u32 %s3, 4
      %s160 = int_to_ptr.hbm [resolvable:$true] %s159
      %165 = dma.vmem_to_hbm [thread:$0]  %s158, 256, %s160, [#allocation4], 128, 128, 8
    $region33: #{tpu_custom_call.1} parent=1 // pred_fallthru
      _
    // Predicated region
    $region34: #{tpu_custom_call.1} parent=1 // pred_check
      _
    $region35: #{tpu_custom_call.1} parent=1 // pred_check_branch
      %167 = sbr.rel (0) target = $region37
    $region36: #{tpu_custom_call.1} parent=1 // pred_region
      %169 = dma.done [#allocation4], 256
    $region37: #{tpu_custom_call.1} parent=1 // pred_fallthru
      _
    %170 = vsyncpa [#allocation3], 1
    %171 = vsyncpa [#allocation6], 1
    %172 = vsyncpa [#allocation4], 1

</llo_original>
